<compile_context>
chip_gen: v7x
topology: tpu7x:2x2x1
jax: 0.10.0
libtpu: 0.0.40
codegen_flags: <defaults>
</compile_context>

<pallas_src>
import functools

import jax
import jax.numpy as jnp
from jax.experimental import pallas as pl
from jax.experimental.pallas import tpu as pltpu

HIDDEN = 32                # hidden width of the DQN Net
NEG_SLOPE = 0.01           # PyTorch nn.LeakyReLU default negative_slope
LANES = 128                # lane width the parameter slab is padded to
MAX_BLOCK_BATCH = 4096     # ~2 KiB/row lane-padded double buffers -> ~8 MiB (< v5e's 16 MiB scoped VMEM)
SINGLE_STEP_MAX = 2048     # below this many rows always use a single grid step


def _round_up(x, m):
    return (x + m - 1) // m * m


def _tensorcores_per_chip():
    """Best-effort: 2 TensorCores per chip on v7x, 1 on v5e/v6e."""
    try:
        kind = jax.devices()[0].device_kind.lower()
    except Exception:  # pragma: no cover - defensive
        return 1
    return 2 if "7" in kind else 1


def _slab_layout(n_state):
    """Row offsets of each parameter inside the packed slab (8-row aligned)."""
    r_w1 = 0
    r_b1 = _round_up(n_state, 8)
    r_w2 = r_b1 + 8
    r_b2 = r_w2 + HIDDEN            # HIDDEN == 32 is 8-aligned
    rows = _round_up(r_b2 + 1, 8)
    return r_w1, r_b1, r_w2, r_b2, rows


def pack_params(w1, b1, w2, b2, dtype=jnp.float32):
    """Pack (w1, b1, w2, b2) into one (rows, 128) slab -> a single input DMA.

    w1: (n_state, HIDDEN), b1: (HIDDEN,), w2: (HIDDEN, n_action), b2: (n_action,)
    (weights already transposed vs. PyTorch's (out, in) convention).
    """
    n_state, hidden = w1.shape
    n_action = w2.shape[1]
    if hidden != HIDDEN:
        raise ValueError(f"expected hidden width {HIDDEN}, got {hidden}")
    if HIDDEN > LANES or n_action > LANES:
        raise ValueError(
            f"pack_params requires hidden ({HIDDEN}) and n_action ({n_action}) <= {LANES} lanes")
    r_w1, r_b1, r_w2, r_b2, rows = _slab_layout(n_state)
    slab = jnp.zeros((rows, LANES), dtype)
    slab = slab.at[r_w1:r_w1 + n_state, 0:HIDDEN].set(w1.astype(dtype))
    slab = slab.at[r_b1, 0:HIDDEN].set(b1.reshape(-1).astype(dtype))
    slab = slab.at[r_w2:r_w2 + HIDDEN, 0:n_action].set(w2.astype(dtype))
    slab = slab.at[r_b2, 0:n_action].set(b2.reshape(-1).astype(dtype))
    return slab


def _mlp_kernel(x_ref, p_ref, o_ref, *, n_state, n_action):
    """One batch tile of: LeakyReLU(x @ w1 + b1) @ w2 + b2."""
    r_w1, r_b1, r_w2, r_b2, _ = _slab_layout(n_state)

    # Static, 8-aligned views into the resident parameter slab (no extra DMAs).
    w1 = p_ref[r_w1:r_w1 + n_state, 0:HIDDEN]
    b1 = p_ref[r_b1:r_b1 + 1, 0:HIDDEN].astype(jnp.float32)
    w2 = p_ref[r_w2:r_w2 + HIDDEN, 0:n_action]
    b2 = p_ref[r_b2:r_b2 + 1, 0:n_action].astype(jnp.float32)

    # Layer 1 on the MXU (f32 or bf16 operands, f32 accumulation) + bias.
    h = jnp.dot(x_ref[...], w1, preferred_element_type=jnp.float32) + b1
    # LeakyReLU + bias math stays f32 on the VPU (no bf16 VALU path on v5e).
    h = jnp.where(h > 0, h, NEG_SLOPE * h)
    # Layer 2: cast LHS to the parameter dtype for the MXU (no-op for f32).
    out = jnp.dot(h.astype(w2.dtype), w2, preferred_element_type=jnp.float32) + b2
    o_ref[...] = out.astype(o_ref.dtype)


def _default_block_batch(batch):
    """One grid step on single-TC chips / small batches; two steps on v7x."""
    n_tc = _tensorcores_per_chip()
    if n_tc > 1 and batch > SINGLE_STEP_MAX:
        tb = _round_up(-(-batch // n_tc), 8)   # split across the 2 TensorCores
    else:
        tb = _round_up(batch, 8)               # single serial grid step
    return max(8, min(tb, MAX_BLOCK_BATCH))


def net_forward(x, params_slab, n_action, *, block_batch=None):
    """Fused DQN MLP forward with a parallel batch grid (no host pad/slice).

    x: (batch, n_state); params_slab: output of `pack_params`.
    """
    batch, n_state = x.shape
    rows, lanes = params_slab.shape

    tb = block_batch if block_batch is not None else _default_block_batch(batch)
    tb = max(8, _round_up(tb, 8))
    grid = (pl.cdiv(batch, tb),)

    kernel = functools.partial(_mlp_kernel, n_state=n_state, n_action=n_action)
    return pl.pallas_call(
        kernel,
        out_shape=jax.ShapeDtypeStruct((batch, n_action), x.dtype),
        grid=grid,
        in_specs=[
            pl.BlockSpec((tb, n_state), lambda i: (i, 0)),   # batch-tiled input
            pl.BlockSpec((rows, lanes), lambda i: (0, 0)),   # resident param slab
        ],
        # Keep last dim = n_action (no lane padding); tiny masked stores are
        # cheaper than 64x more HBM writeback bytes at these shapes.
        out_specs=pl.BlockSpec((tb, n_action), lambda i: (i, 0)),
        compiler_params=pltpu.CompilerParams(
            dimension_semantics=("parallel",),
        ),
    )(x, params_slab)


def init_params(key, n_state, n_action):
    """PyTorch nn.Linear default init: U(-1/sqrt(fan_in), 1/sqrt(fan_in))."""
    k1, k2, k3, k4 = jax.random.split(key, 4)
    bound1 = 1.0 / jnp.sqrt(n_state)
    bound2 = 1.0 / jnp.sqrt(HIDDEN)
    w1 = jax.random.uniform(k1, (n_state, HIDDEN), jnp.float32, -bound1, bound1)
    b1 = jax.random.uniform(k2, (HIDDEN,), jnp.float32, -bound1, bound1)
    w2 = jax.random.uniform(k3, (HIDDEN, n_action), jnp.float32, -bound2, bound2)
    b2 = jax.random.uniform(k4, (n_action,), jnp.float32, -bound2, bound2)
    return w1, b1, w2, b2


def reference_forward(x, w1, b1, w2, b2):
    h = x @ w1 + b1
    h = jnp.where(h > 0, h, NEG_SLOPE * h)
    return h @ w2 + b2


if __name__ == "__main__":
    key = jax.random.PRNGKey(0)
    k_param, k_x_small, k_x_big, k_x_rag = jax.random.split(key, 4)

    n_state, n_action = 4, 2  # CartPole-style DQN shapes
    w1, b1, w2, b2 = init_params(k_param, n_state, n_action)
    slab_f32 = pack_params(w1, b1, w2, b2, jnp.float32)

    # --- small batch, f32 (single grid step) --------------------------------
    x_small = jax.random.normal(k_x_small, (8, n_state), jnp.float32)
    out_small = jax.block_until_ready(net_forward(x_small, slab_f32, n_action))
    ref_small = reference_forward(x_small, w1, b1, w2, b2)
    assert out_small.shape == (8, n_action)
    assert jnp.allclose(out_small, ref_small, atol=1e-5, rtol=1e-5)

    # --- ragged tiny batch (block bigger than batch, masked writeback) ------
    x_rag = jax.random.normal(k_x_rag, (10, n_state), jnp.float32)
    out_rag = jax.block_until_ready(net_forward(x_rag, slab_f32, n_action))
    ref_rag = reference_forward(x_rag, w1, b1, w2, b2)
    assert out_rag.shape == (10, n_action)
    assert jnp.allclose(out_rag, ref_rag, atol=1e-5, rtol=1e-5)

    # --- large batch, f32, default tiling (single big step on 1-TC chips) ---
    x_big = jax.random.normal(k_x_big, (1000, n_state), jnp.float32)
    out_big = jax.block_until_ready(net_forward(x_big, slab_f32, n_action))
    ref_big = reference_forward(x_big, w1, b1, w2, b2)
    assert out_big.shape == (1000, n_action)
    assert jnp.allclose(out_big, ref_big, atol=1e-4, rtol=1e-4)

    # --- large batch, forced multi-step grid with a ragged last block -------
    out_multi = jax.block_until_ready(
        net_forward(x_big, slab_f32, n_action, block_batch=256))
    assert out_multi.shape == (1000, n_action)
    assert jnp.allclose(out_multi, ref_big, atol=1e-4, rtol=1e-4)

    # --- large batch, bf16 MXU operands (v6e/v7x fast path) -----------------
    p_bf = tuple(p.astype(jnp.bfloat16) for p in (w1, b1, w2, b2))
    slab_bf16 = pack_params(*p_bf, dtype=jnp.bfloat16)
    x_bf = x_big.astype(jnp.bfloat16)
    out_bf = jax.block_until_ready(net_forward(x_bf, slab_bf16, n_action))
    ref_bf = reference_forward(
        x_bf.astype(jnp.float32), *(p.astype(jnp.float32) for p in p_bf))
    assert out_bf.shape == (1000, n_action)
    assert float(jnp.max(jnp.abs(out_bf.astype(jnp.float32) - ref_bf))) < 1e-1

    print("KERNEL_OK")
</pallas_src>

<mosaic_0001>
module attributes {stable_mosaic.version = 11 : i64} {
  func.func @_mlp_kernel(%arg0: i32, %arg1: memref<8x4xf32, #tpu.memory_space<vmem>>, %arg2: memref<56x128xf32, #tpu.memory_space<vmem>>, %arg3: memref<8x2xf32, #tpu.memory_space<vmem>>) attributes {dimension_semantics = [#tpu.dimension_semantics<parallel>], iteration_bounds = array<i64: 1>, scalar_prefetch = 0 : i64, scratch_operands = 0 : i64, tpu.core_type = #tpu.core_type<tc>, window_params = [{transform_indices = @transform_0, window_bounds = array<i64: 8, 4>}, {pipeline_mode = #tpu.pipeline_mode<synchronous>, transform_indices = @transform_1, window_bounds = array<i64: 56, 128>}, {transform_indices = @transform_2, window_bounds = array<i64: 8, 2>}]} {
    %c0 = arith.constant 0 : index
    %c0_0 = arith.constant 0 : index
    %0 = vector.load %arg2[%c0, %c0_0] : memref<56x128xf32, #tpu.memory_space<vmem>>, vector<4x32xf32>
    %c8 = arith.constant 8 : index
    %c0_1 = arith.constant 0 : index
    %1 = vector.load %arg2[%c8, %c0_1] : memref<56x128xf32, #tpu.memory_space<vmem>>, vector<1x32xf32>
    %c16 = arith.constant 16 : index
    %c0_2 = arith.constant 0 : index
    %2 = vector.load %arg2[%c16, %c0_2] : memref<56x128xf32, #tpu.memory_space<vmem>>, vector<32x2xf32>
    %c48 = arith.constant 48 : index
    %c0_3 = arith.constant 0 : index
    %3 = vector.load %arg2[%c48, %c0_3] : memref<56x128xf32, #tpu.memory_space<vmem>>, vector<1x2xf32>
    %c0_4 = arith.constant 0 : index
    %c0_5 = arith.constant 0 : index
    %4 = vector.load %arg1[%c0_4, %c0_5] : memref<8x4xf32, #tpu.memory_space<vmem>>, vector<8x4xf32>
    %cst = arith.constant dense<0.000000e+00> : vector<8x32xf32>
    %5 = tpu.matmul %4, %0, %cst {dimension_numbers = #tpu.dot_dimension_numbers<[1], [0], [0], [1], [0, 0, 1, 1], [], []>} : vector<8x4xf32>, vector<4x32xf32>, vector<8x32xf32> -> vector<8x32xf32>
    %6 = vector.broadcast %1 : vector<1x32xf32> to vector<8x32xf32>
    %7 = arith.addf %5, %6 : vector<8x32xf32>
    %cst_6 = arith.constant 0.000000e+00 : f32
    %8 = vector.broadcast %cst_6 : f32 to vector<8x32xf32>
    %9 = arith.cmpf ogt, %7, %8 : vector<8x32xf32>
    %cst_7 = arith.constant 0.00999999977 : f32
    %10 = vector.broadcast %cst_7 : f32 to vector<8x32xf32>
    %11 = arith.mulf %10, %7 : vector<8x32xf32>
    %12 = arith.select %9, %7, %11 : vector<8x32xi1>, vector<8x32xf32>
    %cst_8 = arith.constant dense<0.000000e+00> : vector<8x2xf32>
    %13 = tpu.matmul %12, %2, %cst_8 {dimension_numbers = #tpu.dot_dimension_numbers<[1], [0], [0], [1], [0, 0, 1, 1], [], []>} : vector<8x32xf32>, vector<32x2xf32>, vector<8x2xf32> -> vector<8x2xf32>
    %14 = vector.broadcast %3 : vector<1x2xf32> to vector<8x2xf32>
    %15 = arith.addf %13, %14 : vector<8x2xf32>
    %c0_9 = arith.constant 0 : index
    %c0_10 = arith.constant 0 : index
    %16 = vector.load %arg3[%c0_9, %c0_10] : memref<8x2xf32, #tpu.memory_space<vmem>>, vector<8x2xf32>
    tpu.vector_store %arg3[%c0_9, %c0_10], %15 {strides = array<i32>} : memref<8x2xf32, #tpu.memory_space<vmem>>, vector<8x2xf32>,
    return
  }
  func.func @transform_0(%arg0: i32) -> (i32, i32) {
    %c0_i32 = arith.constant 0 : i32
    %c0_i32_0 = arith.constant 0 : i32
    return %arg0, %c0_i32 : i32, i32
  }
  func.func @transform_1(%arg0: i32) -> (i32, i32) {
    %c0_i32 = arith.constant 0 : i32
    %c0_i32_0 = arith.constant 0 : i32
    %c0_i32_1 = arith.constant 0 : i32
    return %c0_i32, %c0_i32_0 : i32, i32
  }
  func.func @transform_2(%arg0: i32) -> (i32, i32) {
    %c0_i32 = arith.constant 0 : i32
    %c0_i32_0 = arith.constant 0 : i32
    return %arg0, %c0_i32 : i32, i32
  }
}

</mosaic_0001>

<llo_original>
// kernel: tpu_custom_call.1
$region0: #{tpu_custom_call.1}
  #allocation0 [shape = 'u32[]', space=smem, size = 0x4, offset = 0x4, fixed_abs, tag = 'smem constant byte address 0x4 - core index']
  #allocation1 [shape = 'u32[144,128]{1,0:T(1,128)}', space=vmem, size = 0x12000, scoped, tag = 'internal scratch']
  %s0 = inlined_call_operand.vmem [shape: f32[8,4], index: 0, kind: input, shape index: {}]
  %s1 = inlined_call_operand.hbm [shape: f32[56,128], index: 1, kind: input, shape index: {}]
  %s2 = inlined_call_operand.vmem [shape: f32[8,2], index: 2, kind: output, shape index: {}]
  %s3 = sld [smem:[#allocation0]]
  $region22: #{tpu_custom_call.1} parent=0
    _
  %s5 = ssub.s32 1, %s3
  %s6 = scalar_select 0, %s5, %s3
  $region1: #{tpu_custom_call.1} parent=0
    #allocation2 [shape = 'u8[28672]{0}', space=vmem, size = 0x7000, scoped, tag = 'input window, operand 1, single buffered']
    #allocation3 [shape = 's32[1]{0}', space=sflag, size = 0x4, scoped, tag = 'scoped memory for tpu_custom_call.1']
    %7 = vsyncpa [#allocation3], 0
    // Predicated region
    $region2: #{tpu_custom_call.1} parent=1 // pred_check
      _
    $region3: #{tpu_custom_call.1} parent=1 // pred_check_branch
      %9 = sbr.rel (0) target = $region5
    $region4: #{tpu_custom_call.1} parent=1 // pred_region
      _
    $region5: #{tpu_custom_call.1} parent=1 // pred_fallthru
      _
    // Predicated region
    $region6: #{tpu_custom_call.1} parent=1 // pred_check
      _
    $region7: #{tpu_custom_call.1} parent=1 // pred_check_branch
      %11 = sbr.rel (0) target = $region9
    $region8: #{tpu_custom_call.1} parent=1 // pred_region
      %s13 = ssub.s32 896, 896
      %14 = vsyncadd [#allocation3], %s13
      %s15 = sshll.u32 [#allocation2], 4
      %s16 = int_to_ptr.vmem [resolvable:$true] %s15
      %21 = dma.hbm_to_vmem [thread:$0]  %s1, 896, %s16, [#allocation3], 128, 128, 8
    $region9: #{tpu_custom_call.1} parent=1 // pred_fallthru
      _
    // Predicated region
    $region10: #{tpu_custom_call.1} parent=1 // pred_check
      _
    $region11: #{tpu_custom_call.1} parent=1 // pred_check_branch
      %23 = sbr.rel (0) target = $region13
    $region12: #{tpu_custom_call.1} parent=1 // pred_region
      %24 = dma.done [#allocation3], 896
    $region13: #{tpu_custom_call.1} parent=1 // pred_fallthru
      _
    %v25 = vld [vmem:[#allocation2] sm:$0xf]
    %v26 = vld [vmem:[#allocation2 + $0x8] sm:$0x1]
    %v27 = vld [vmem:[#allocation2 + $0x10] sm:$0xff]
    %v28 = vld [vmem:[#allocation2 + $0x18] sm:$0xff]
    %v29 = vld [vmem:[#allocation2 + $0x20] sm:$0xff]
    %v30 = vld [vmem:[#allocation2 + $0x28] sm:$0xff]
    %v31 = vld [vmem:[#allocation2 + $0x30] sm:$0x1]
    %v32 = vld [vmem:[%s0] sm:$0xff]
    %v33 = vlaneseq
    %v34 = vshrl.u32 %v33, 7
    %v35 = vsub.s32 0, %v34
    %v36 = vrot.slane %v26, %v35
    %vm37 = vcmask 31744
    %v39 = vsel %vm37, %v32, 0
    %vm41 = vcmask 1043456
    %v43 = vsel %vm41, %v25, 0
    %45 = vmatprep.subr.mxu0 0.0
    %46 = vmatpush1.msra.mxu0 %v43
    %47 = vmatprep.subr.mxu0 0.0
    %48 = vmatpush1.msra.mxu0 0.0
    %49 = vmatprep.subr.mxu0 0.0
    %50 = vmatpush1.msra.mxu0 0.0
    %51 = vmatprep.subr.mxu0 0.0
    %52 = vmatpush1.msra.mxu0 0.0
    %53 = vmatprep.subr.mxu0 0.0
    %54 = vmatpush1.msra.mxu0 0.0
    %55 = vmatprep.subr.mxu0 0.0
    %56 = vmatpush1.msra.mxu0 0.0
    %57 = vmatprep.subr.mxu0 0.0
    %58 = vmatpush1.msra.mxu0 0.0
    %59 = vmatprep.subr.mxu0 0.0
    %60 = vmatpush1.msra.mxu0 0.0
    %61 = vmatprep.subr.mxu0 0.0
    %62 = vmatpush1.msra.mxu0 0.0
    %63 = vmatprep.subr.mxu0 0.0
    %64 = vmatpush1.msra.mxu0 0.0
    %65 = vmatprep.subr.mxu0 0.0
    %66 = vmatpush1.msra.mxu0 0.0
    %67 = vmatprep.subr.mxu0 0.0
    %68 = vmatpush1.msra.mxu0 0.0
    %69 = vmatprep.subr.mxu0 0.0
    %70 = vmatpush1.msra.mxu0 0.0
    %71 = vmatprep.subr.mxu0 0.0
    %72 = vmatpush1.msra.mxu0 0.0
    %73 = vmatprep.subr.mxu0 0.0
    %74 = vmatpush1.msra.mxu0 0.0
    %75 = vmatprep.subr.mxu0 0.0
    %76 = vmatpush1.msra.mxu0 0.0
    %77 = vmatprep.subr.mxu0 0.0
    %78 = vmatpush1.msra.mxu0 0.0
    %79 = vmatprep.subr.mxu0 0.0
    %80 = vmatpush1.msra.mxu0 0.0
    %81 = vmatprep.subr.mxu0 0.0
    %82 = vmatpush1.msra.mxu0 0.0
    %83 = vmatprep.subr.mxu0 0.0
    %84 = vmatpush1.msra.mxu0 0.0
    %85 = vmatprep.subr.mxu0 0.0
    %86 = vmatpush1.msra.mxu0 0.0
    %87 = vmatprep.subr.mxu0 0.0
    %88 = vmatpush1.msra.mxu0 0.0
    %89 = vmatprep.subr.mxu0 0.0
    %90 = vmatpush1.msra.mxu0 0.0
    %91 = vmatprep.subr.mxu0 0.0
    %92 = vmatpush1.msra.mxu0 0.0
    %93 = vmatprep.subr.mxu0 0.0
    %94 = vmatpush1.msra.mxu0 0.0
    %95 = vmatprep.subr.mxu0 0.0
    %96 = vmatpush1.msra.mxu0 0.0
    %97 = vmatprep.subr.mxu0 0.0
    %98 = vmatpush1.msra.mxu0 0.0
    %99 = vmatprep.subr.mxu0 0.0
    %100 = vmatpush1.msra.mxu0 0.0
    %101 = vmatprep.subr.mxu0 0.0
    %102 = vmatpush1.msra.mxu0 0.0
    %103 = vmatprep.subr.mxu0 0.0
    %104 = vmatpush1.msra.mxu0 0.0
    %105 = vmatprep.subr.mxu0 0.0
    %106 = vmatpush1.msra.mxu0 0.0
    %107 = vmatprep.subr.mxu0 0.0
    %108 = vmatpush1.msra.mxu0 0.0
    %109 = vmatprep.mubr.f32.mxu0 0.0
    %110 = vmatmul.mubr.f32.gmra.mrb[0].mxu0 %v39
    %v111 = vpop.f32.mrb[0].mxu0
    %v112 = vadd.f32 %v36, %v111
    %v113 = vpop.f32.mrb[0].mxu0
    %114 = vdwg.mxu0
    %vm115 = vcmp.gt.f32.partialorder %v112, 0.0
    %v116 = vmul.f32 %v112, 0.01
    %v117 = vsel %vm115, %v112, %v116
    %v118 = vlaneseq
    %v119 = vshrl.u32 %v118, 7
    %v120 = vsub.s32 0, %v119
    %v121 = vrot.slane %v31, %v120
    %vm122 = vcmask 261120
    %v124 = vsel %vm122, %v117, 0
    %126 = vmatprep.subr.mxu0 0.0
    %127 = vmatpush1.msra.mxu0 %v27
    %128 = vmatprep.subr.mxu0 0.0
    %129 = vmatpush1.msra.mxu0 %v28
    %130 = vmatprep.subr.mxu0 0.0
    %131 = vmatpush1.msra.mxu0 %v29
    %132 = vmatprep.subr.mxu0 0.0
    %133 = vmatpush1.msra.mxu0 %v30
    %134 = vmatprep.subr.mxu0 0.0
    %135 = vmatpush1.msra.mxu0 0.0
    %136 = vmatprep.subr.mxu0 0.0
    %137 = vmatpush1.msra.mxu0 0.0
    %138 = vmatprep.subr.mxu0 0.0
    %139 = vmatpush1.msra.mxu0 0.0
    %140 = vmatprep.subr.mxu0 0.0
    %141 = vmatpush1.msra.mxu0 0.0
    %142 = vmatprep.subr.mxu0 0.0
    %143 = vmatpush1.msra.mxu0 0.0
    %144 = vmatprep.subr.mxu0 0.0
    %145 = vmatpush1.msra.mxu0 0.0
    %146 = vmatprep.subr.mxu0 0.0
    %147 = vmatpush1.msra.mxu0 0.0
    %148 = vmatprep.subr.mxu0 0.0
    %149 = vmatpush1.msra.mxu0 0.0
    %150 = vmatprep.subr.mxu0 0.0
    %151 = vmatpush1.msra.mxu0 0.0
    %152 = vmatprep.subr.mxu0 0.0
    %153 = vmatpush1.msra.mxu0 0.0
    %154 = vmatprep.subr.mxu0 0.0
    %155 = vmatpush1.msra.mxu0 0.0
    %156 = vmatprep.subr.mxu0 0.0
    %157 = vmatpush1.msra.mxu0 0.0
    %158 = vmatprep.subr.mxu0 0.0
    %159 = vmatpush1.msra.mxu0 0.0
    %160 = vmatprep.subr.mxu0 0.0
    %161 = vmatpush1.msra.mxu0 0.0
    %162 = vmatprep.subr.mxu0 0.0
    %163 = vmatpush1.msra.mxu0 0.0
    %164 = vmatprep.subr.mxu0 0.0
    %165 = vmatpush1.msra.mxu0 0.0
    %166 = vmatprep.subr.mxu0 0.0
    %167 = vmatpush1.msra.mxu0 0.0
    %168 = vmatprep.subr.mxu0 0.0
    %169 = vmatpush1.msra.mxu0 0.0
    %170 = vmatprep.subr.mxu0 0.0
    %171 = vmatpush1.msra.mxu0 0.0
    %172 = vmatprep.subr.mxu0 0.0
    %173 = vmatpush1.msra.mxu0 0.0
    %174 = vmatprep.subr.mxu0 0.0
    %175 = vmatpush1.msra.mxu0 0.0
    %176 = vmatprep.subr.mxu0 0.0
    %177 = vmatpush1.msra.mxu0 0.0
    %178 = vmatprep.subr.mxu0 0.0
    %179 = vmatpush1.msra.mxu0 0.0
    %180 = vmatprep.subr.mxu0 0.0
    %181 = vmatpush1.msra.mxu0 0.0
    %182 = vmatprep.subr.mxu0 0.0
    %183 = vmatpush1.msra.mxu0 0.0
    %184 = vmatprep.subr.mxu0 0.0
    %185 = vmatpush1.msra.mxu0 0.0
    %186 = vmatprep.subr.mxu0 0.0
    %187 = vmatpush1.msra.mxu0 0.0
    %188 = vmatprep.subr.mxu0 0.0
    %189 = vmatpush1.msra.mxu0 0.0
    %190 = vmatprep.mubr.f32.mxu0 0.0
    %191 = vmatmul.mubr.f32.gmra.mrb[0].mxu0 %v124
    %v192 = vpop.f32.mrb[0].mxu0
    %v193 = vadd.f32 %v121, %v192
    %v194 = vpop.f32.mrb[0].mxu0
    %195 = vdwg.mxu0
    %vm196 = vcmask 15360
    %197 = vst.msk [vmem:[%s2] sm:$0xff] %vm196, %v193
    // Predicated region
    $region14: #{tpu_custom_call.1} parent=1 // pred_check
      _
    $region15: #{tpu_custom_call.1} parent=1 // pred_check_branch
      %199 = sbr.rel (0) target = $region17
    $region16: #{tpu_custom_call.1} parent=1 // pred_region
      _
    $region17: #{tpu_custom_call.1} parent=1 // pred_fallthru
      _
    // Predicated region
    $region18: #{tpu_custom_call.1} parent=1 // pred_check
      _
    $region19: #{tpu_custom_call.1} parent=1 // pred_check_branch
      %201 = sbr.rel (0) target = $region21
    $region20: #{tpu_custom_call.1} parent=1 // pred_region
      _
    $region21: #{tpu_custom_call.1} parent=1 // pred_fallthru
      _
    %202 = vsyncpa [#allocation3], 1

</llo_original>
